<compile_context>
chip_gen: v7x
topology: tpu7x:2x2x1
jax: 0.10.0
libtpu: 0.0.40
codegen_flags: <defaults>
</compile_context>

<pallas_src>
import numpy as np
import jax
import jax.numpy as jnp
from jax.experimental import pallas as pl
from jax.experimental.pallas import tpu as pltpu

BN_EPS = 1e-5


# ----------------------------------------------------------------------------
# Host-side helpers
# ----------------------------------------------------------------------------
def _sel_np(lin, lout, k_taps):
    """(lin, k_taps*2*lout) 0/1 matrix.

    Column (k, parity, j) of x @ S is x[2*j + parity + k - 1] (0 when the
    padding=1 position falls outside [0, lin)), i.e. the conv k-shift, zero
    padding and the MaxPool1d(2) even/odd de-interleave in one matmul.
    """
    cols = np.arange(k_taps * 2 * lout)
    k = cols // (2 * lout)
    rem = cols % (2 * lout)
    parity = rem // lout
    j = rem % lout
    tgt = 2 * j + parity + k - 1
    rows = np.arange(lin)[:, None]
    return (rows == tgt[None, :]).astype(np.float32)


def _make_montage_kernel(K, C, L1, L2, H, n_cls, sel2_col0):
    """Build the fused kernel for fixed (static) model dims."""

    def kernel(x_ref, sel_ref, small_ref, w2s_ref, wfc_ref, out_ref):
        TB = x_ref.shape[0]
        L0 = x_ref.shape[2]
        x = x_ref[...].astype(jnp.float32).reshape(TB, L0)       # (TB, L0)

        # ---------------- conv block 1 (Cin == 1): sel-first ----------------
        sel1 = sel_ref[:, 0:K * 2 * L1]                          # (L0, K*2*L1)
        g1 = jnp.dot(x, sel1, preferred_element_type=jnp.float32)  # (TB, K*2*L1)
        # per-tap scaled weights live in SMALL cols [0:K]; Cin==1 so the weight
        # contraction is a pure VPU broadcast multiply (no extra matmuls).
        acc1 = small_ref[:, 0:1][None, :, :] * g1[:, None, 0:2 * L1]
        for k in range(1, K):                                    # K == 3, static
            acc1 = acc1 + (small_ref[:, k:k + 1][None, :, :]
                           * g1[:, None, k * 2 * L1:(k + 1) * 2 * L1])
        shift1 = small_ref[:, K:K + 1]                           # (C, 1)
        h1 = jnp.maximum(
            jnp.maximum(acc1[:, :, :L1], acc1[:, :, L1:2 * L1]) + shift1, 0.0)
        # h1: (TB, C, L1)

        # ---------------- conv block 2: weight-first ------------------------
        # One hoisted broadcast + one batched einsum mixes channels for all
        # K taps at once: y[b, k*C + o, l] = sum_i w2s[k*C+o, i] * h1[b, i, l].
        w2b = jnp.broadcast_to(w2s_ref[...][None], (TB, K * C, C))
        y = jnp.einsum('bqi,bil->bql', w2b, h1,
                       preferred_element_type=jnp.float32)       # (TB, K*C, L1)
        sel2 = sel_ref[0:L1, sel2_col0:sel2_col0 + K * 2 * L2]   # (L1, K*2*L2)
        g2 = jnp.dot(y.reshape(TB * K * C, L1), sel2,
                     preferred_element_type=jnp.float32)         # (TB*K*C, K*2*L2)
        g2 = g2.reshape(TB, K, C, K * 2 * L2)
        # take the k-th shift block for the k-th tap group and sum over taps
        acc2 = g2[:, 0, :, 0:2 * L2]
        for k in range(1, K):
            acc2 = acc2 + g2[:, k, :, k * 2 * L2:(k + 1) * 2 * L2]
        shift2 = small_ref[:, K + 1:K + 2]                       # (C, 1)
        h2 = jnp.maximum(
            jnp.maximum(acc2[:, :, :L2], acc2[:, :, L2:2 * L2]) + shift2, 0.0)
        # h2: (TB, C, L2)

        # ---------------- FC head -------------------------------------------
        # FC1 as ONE matmul: (TB*C, L2) @ (L2, C*H); the PyTorch channel-major
        # flatten is recovered by summing the channel-diagonal H-blocks.
        fc1w = wfc_ref[0:L2, 0:C * H]
        zp = jnp.dot(h2.reshape(TB * C, L2), fc1w,
                     preferred_element_type=jnp.float32)         # (TB*C, C*H)
        zp = zp.reshape(TB, C, C * H)
        z = zp[:, 0, 0:H]
        for c in range(1, C):                                    # C == 8, static
            z = z + zp[:, c, c * H:(c + 1) * H]
        fc1b = small_ref[0:1, K + 2:K + 2 + H]
        z = jnp.maximum(z + fc1b, 0.0)

        fc2w = wfc_ref[0:H, C * H:C * H + n_cls]
        fc2b = small_ref[0:1, K + 2 + H:K + 2 + H + n_cls]
        z = jnp.dot(z, fc2w, preferred_element_type=jnp.float32) + fc2b

        # numerically stable log_softmax over the class dimension
        m = jnp.max(z, axis=-1, keepdims=True)
        lse = jnp.log(jnp.sum(jnp.exp(z - m), axis=-1, keepdims=True)) + m
        out_ref[...] = z - lse

    return kernel


# ----------------------------------------------------------------------------
# Wrapper: fold BN, pack operands, launch the kernel (batch tiled "parallel")
# ----------------------------------------------------------------------------
@jax.jit
def montage_forward(x, params):
    """x: (B, 1, 98) float32 (PyTorch NCL).  Returns (B, 4) log-probs."""
    f32 = jnp.float32
    B, _, L0 = x.shape
    C, _, K = params["conv1_w"].shape
    H = params["fc1_w"].shape[1]
    n_cls = params["fc2_w"].shape[1]
    L1 = (L0 + 2 - K + 1) // 2
    L2 = (L1 + 2 - K + 1) // 2

    # ---- fold inference-mode BatchNorm into conv weights / per-chan shifts --
    s1 = params["bn1_gamma"] / jnp.sqrt(params["bn1_var"] + BN_EPS)
    w1t = (params["conv1_w"][:, 0, :] * s1[:, None]).astype(f32)       # (C, K)
    shift1 = ((params["conv1_b"] - params["bn1_mean"]) * s1
              + params["bn1_beta"]).astype(f32)                        # (C,)
    s2 = params["bn2_gamma"] / jnp.sqrt(params["bn2_var"] + BN_EPS)
    w2s = ((params["conv2_w"] * s2[:, None, None])
           .transpose(2, 0, 1).reshape(K * C, C)).astype(f32)          # (K*C, C)
    shift2 = ((params["conv2_b"] - params["bn2_mean"]) * s2
              + params["bn2_beta"]).astype(f32)                        # (C,)

    # ---- packed small-vector operand: conv1 taps | shifts | fc biases ------
    small = jnp.zeros((C, K + 2 + H + n_cls), f32)
    small = small.at[:, 0:K].set(w1t)
    small = small.at[:, K].set(shift1)
    small = small.at[:, K + 1].set(shift2)
    small = small.at[0, K + 2:K + 2 + H].set(params["fc1_b"].astype(f32))
    small = small.at[0, K + 2 + H:K + 2 + H + n_cls].set(
        params["fc2_b"].astype(f32))

    # ---- packed FC weights: block-arranged fc1 | fc2 ------------------------
    # fc1w_blk[l, c*H + h] = fc1_w[c*L2 + l, h]  (PyTorch channel-major flatten)
    fc1w_blk = (params["fc1_w"].reshape(C, L2, H).transpose(1, 0, 2)
                .reshape(L2, C * H)).astype(f32)
    wfc = jnp.zeros((max(L2, H), C * H + n_cls), f32)
    wfc = wfc.at[0:L2, 0:C * H].set(fc1w_blk)
    wfc = wfc.at[0:H, C * H:].set(params["fc2_w"].astype(f32))

    # ---- host-precomputed selection matrices (trace-time constants) ---------
    sel1 = _sel_np(L0, L1, K)                                # (L0, K*2*L1)
    sel2 = _sel_np(L1, L2, K)                                # (L1, K*2*L2)
    sel2_col0 = ((sel1.shape[1] + 127) // 128) * 128          # 128-lane aligned
    sel_np = np.zeros((L0, sel2_col0 + sel2.shape[1]), np.float32)
    sel_np[:, :sel1.shape[1]] = sel1
    sel_np[:L1, sel2_col0:] = sel2
    sel = jnp.asarray(sel_np)

    kernel = _make_montage_kernel(K, C, L1, L2, H, n_cls, sel2_col0)

    # Batch tile: one grid step per TB rows; "parallel" lets megacore / v7x
    # split the batch across TensorCores and double-buffer the x / out DMA.
    TB = B if B <= 64 else 64
    grid = (pl.cdiv(B, TB),)

    def _const(a):
        nd = a.ndim
        return pl.BlockSpec(a.shape, lambda i, _nd=nd: (0,) * _nd)

    return pl.pallas_call(
        kernel,
        out_shape=jax.ShapeDtypeStruct((B, n_cls), f32),
        grid=grid,
        in_specs=[pl.BlockSpec((TB, 1, L0), lambda i: (i, 0, 0)),
                  _const(sel), _const(small), _const(w2s), _const(wfc)],
        out_specs=pl.BlockSpec((TB, n_cls), lambda i: (i, 0)),
        compiler_params=pltpu.CompilerParams(
            dimension_semantics=("parallel",)),
    )(x, sel, small, w2s, wfc)


# ----------------------------------------------------------------------------
# Pure-JAX reference (correctness check only)
# ----------------------------------------------------------------------------
def _ref_conv_block(x, w, b, gamma, beta, mu, var):
    y = jax.lax.conv_general_dilated(x, w, (1,), [(1, 1)],
                                     dimension_numbers=("NCH", "OIH", "NCH"))
    y = y + b[None, :, None]
    s = gamma / jnp.sqrt(var + BN_EPS)
    y = y * s[None, :, None] + (beta - mu * s)[None, :, None]
    y = jnp.maximum(y, 0.0)
    B, C, Lc = y.shape
    Lout = Lc // 2
    return y[:, :, :2 * Lout].reshape(B, C, Lout, 2).max(axis=-1)


def _ref_forward(x, p):
    h = _ref_conv_block(x, p["conv1_w"], p["conv1_b"], p["bn1_gamma"],
                        p["bn1_beta"], p["bn1_mean"], p["bn1_var"])
    h = _ref_conv_block(h, p["conv2_w"], p["conv2_b"], p["bn2_gamma"],
                        p["bn2_beta"], p["bn2_mean"], p["bn2_var"])
    flat = h.reshape(h.shape[0], -1)
    z = jnp.maximum(flat @ p["fc1_w"] + p["fc1_b"], 0.0)
    z = z @ p["fc2_w"] + p["fc2_b"]
    return jax.nn.log_softmax(z, axis=1)


# ----------------------------------------------------------------------------
if __name__ == "__main__":
    # model_para = (kernel_size=3, cnn_feature=8, linear_size(ignored), dp=0.1,
    #               out_feature=32, Con_layer=2, linear_layer=2)
    K, C, OUT_F, CON_LAYER = 3, 8, 32, 2
    L_IN = 98                        # hard-coded in the module
    lin_size = L_IN
    for _ in range(CON_LAYER):
        lin_size = int(((lin_size + 2 - K) / 1 + 1) // 2)    # 49 -> 24
    F = C * lin_size                 # 192

    key = jax.random.PRNGKey(0)
    ks = jax.random.split(key, 20)
    f32 = jnp.float32
    params = {
        "conv1_w": 0.2 * jax.random.normal(ks[0], (C, 1, K), f32),
        "conv1_b": 0.1 * jax.random.normal(ks[1], (C,), f32),
        "bn1_gamma": jax.random.uniform(ks[2], (C,), f32, 0.8, 1.2),
        "bn1_beta": 0.1 * jax.random.normal(ks[3], (C,), f32),
        "bn1_mean": 0.1 * jax.random.normal(ks[4], (C,), f32),
        "bn1_var": jax.random.uniform(ks[5], (C,), f32, 0.5, 1.5),
        "conv2_w": 0.2 * jax.random.normal(ks[6], (C, C, K), f32),
        "conv2_b": 0.1 * jax.random.normal(ks[7], (C,), f32),
        "bn2_gamma": jax.random.uniform(ks[8], (C,), f32, 0.8, 1.2),
        "bn2_beta": 0.1 * jax.random.normal(ks[9], (C,), f32),
        "bn2_mean": 0.1 * jax.random.normal(ks[10], (C,), f32),
        "bn2_var": jax.random.uniform(ks[11], (C,), f32, 0.5, 1.5),
        "fc1_w": 0.1 * jax.random.normal(ks[12], (F, OUT_F), f32),
        "fc1_b": 0.1 * jax.random.normal(ks[13], (OUT_F,), f32),
        "fc2_w": 0.1 * jax.random.normal(ks[14], (OUT_F, 4), f32),
        "fc2_b": 0.1 * jax.random.normal(ks[15], (4,), f32),
    }

    B = 2
    x = jax.random.normal(ks[16], (B, 1, L_IN), f32)   # NCL, like PyTorch Conv1d

    out = jax.block_until_ready(montage_forward(x, params))
    ref = jax.block_until_ready(_ref_forward(x, params))

    assert out.shape == (B, 4), out.shape
    assert jnp.allclose(out, ref, atol=1e-4, rtol=1e-4), (out, ref)
    print("KERNEL_OK")
</pallas_src>

<mosaic_0001>
module attributes {stable_mosaic.version = 11 : i64} {
  func.func @kernel(%arg0: i32, %arg1: memref<2x1x98xf32, #tpu.memory_space<vmem>>, %arg2: memref<98x528xf32, #tpu.memory_space<vmem>>, %arg3: memref<8x41xf32, #tpu.memory_space<vmem>>, %arg4: memref<24x8xf32, #tpu.memory_space<vmem>>, %arg5: memref<32x260xf32, #tpu.memory_space<vmem>>, %arg6: memref<2x4xf32, #tpu.memory_space<vmem>>) attributes {dimension_semantics = [#tpu.dimension_semantics<parallel>], iteration_bounds = array<i64: 1>, scalar_prefetch = 0 : i64, scratch_operands = 0 : i64, tpu.core_type = #tpu.core_type<tc>, window_params = [{transform_indices = @transform_0, window_bounds = array<i64: 2, 1, 98>}, {pipeline_mode = #tpu.pipeline_mode<synchronous>, transform_indices = @transform_1, window_bounds = array<i64: 98, 528>}, {pipeline_mode = #tpu.pipeline_mode<synchronous>, transform_indices = @transform_2, window_bounds = array<i64: 8, 41>}, {pipeline_mode = #tpu.pipeline_mode<synchronous>, transform_indices = @transform_3, window_bounds = array<i64: 24, 8>}, {pipeline_mode = #tpu.pipeline_mode<synchronous>, transform_indices = @transform_4, window_bounds = array<i64: 32, 260>}, {transform_indices = @transform_5, window_bounds = array<i64: 2, 4>}]} {
    %c0 = arith.constant 0 : index
    %c0_0 = arith.constant 0 : index
    %c0_1 = arith.constant 0 : index
    %0 = vector.load %arg1[%c0, %c0_0, %c0_1] : memref<2x1x98xf32, #tpu.memory_space<vmem>>, vector<2x1x98xf32>
    %1 = vector.shape_cast %0 : vector<2x1x98xf32> to vector<2x98xf32>
    %c0_2 = arith.constant 0 : index
    %c0_3 = arith.constant 0 : index
    %2 = vector.load %arg2[%c0_2, %c0_3] : memref<98x528xf32, #tpu.memory_space<vmem>>, vector<98x294xf32>
    %cst = arith.constant dense<0.000000e+00> : vector<2x294xf32>
    %3 = tpu.matmul %1, %2, %cst {dimension_numbers = #tpu.dot_dimension_numbers<[1], [0], [0], [1], [0, 0, 1, 1], [], []>} : vector<2x98xf32>, vector<98x294xf32>, vector<2x294xf32> -> vector<2x294xf32>
    %c0_4 = arith.constant 0 : index
    %c0_5 = arith.constant 0 : index
    %4 = vector.load %arg3[%c0_4, %c0_5] : memref<8x41xf32, #tpu.memory_space<vmem>>, vector<8x1xf32>
    %5 = vector.shape_cast %4 : vector<8x1xf32> to vector<1x8x1xf32>
    %6 = vector.extract_strided_slice %3 {offsets = [0, 0], sizes = [2, 98], strides = [1, 1]} : vector<2x294xf32> to vector<2x98xf32>
    %7 = vector.shape_cast %6 : vector<2x98xf32> to vector<2x1x98xf32>
    %8 = vector.broadcast %5 : vector<1x8x1xf32> to vector<2x8x98xf32>
    %9 = vector.broadcast %7 : vector<2x1x98xf32> to vector<2x8x98xf32>
    %10 = arith.mulf %8, %9 : vector<2x8x98xf32>
    %c0_6 = arith.constant 0 : index
    %c1 = arith.constant 1 : index
    %11 = vector.load %arg3[%c0_6, %c1] : memref<8x41xf32, #tpu.memory_space<vmem>>, vector<8x1xf32>
    %12 = vector.shape_cast %11 : vector<8x1xf32> to vector<1x8x1xf32>
    %13 = vector.extract_strided_slice %3 {offsets = [0, 98], sizes = [2, 98], strides = [1, 1]} : vector<2x294xf32> to vector<2x98xf32>
    %14 = vector.shape_cast %13 : vector<2x98xf32> to vector<2x1x98xf32>
    %15 = vector.broadcast %12 : vector<1x8x1xf32> to vector<2x8x98xf32>
    %16 = vector.broadcast %14 : vector<2x1x98xf32> to vector<2x8x98xf32>
    %17 = arith.mulf %15, %16 : vector<2x8x98xf32>
    %18 = arith.addf %10, %17 : vector<2x8x98xf32>
    %c0_7 = arith.constant 0 : index
    %c2 = arith.constant 2 : index
    %19 = vector.load %arg3[%c0_7, %c2] : memref<8x41xf32, #tpu.memory_space<vmem>>, vector<8x1xf32>
    %20 = vector.shape_cast %19 : vector<8x1xf32> to vector<1x8x1xf32>
    %21 = vector.extract_strided_slice %3 {offsets = [0, 196], sizes = [2, 98], strides = [1, 1]} : vector<2x294xf32> to vector<2x98xf32>
    %22 = vector.shape_cast %21 : vector<2x98xf32> to vector<2x1x98xf32>
    %23 = vector.broadcast %20 : vector<1x8x1xf32> to vector<2x8x98xf32>
    %24 = vector.broadcast %22 : vector<2x1x98xf32> to vector<2x8x98xf32>
    %25 = arith.mulf %23, %24 : vector<2x8x98xf32>
    %26 = arith.addf %18, %25 : vector<2x8x98xf32>
    %c0_8 = arith.constant 0 : index
    %c3 = arith.constant 3 : index
    %27 = vector.load %arg3[%c0_8, %c3] : memref<8x41xf32, #tpu.memory_space<vmem>>, vector<8x1xf32>
    %28 = vector.extract_strided_slice %26 {offsets = [0, 0, 0], sizes = [2, 8, 49], strides = [1, 1, 1]} : vector<2x8x98xf32> to vector<2x8x49xf32>
    %29 = vector.extract_strided_slice %26 {offsets = [0, 0, 49], sizes = [2, 8, 49], strides = [1, 1, 1]} : vector<2x8x98xf32> to vector<2x8x49xf32>
    %30 = arith.maximumf %28, %29 : vector<2x8x49xf32>
    %31 = vector.shape_cast %27 : vector<8x1xf32> to vector<1x8x1xf32>
    %32 = vector.broadcast %31 : vector<1x8x1xf32> to vector<2x8x49xf32>
    %33 = arith.addf %30, %32 : vector<2x8x49xf32>
    %cst_9 = arith.constant 0.000000e+00 : f32
    %34 = vector.broadcast %cst_9 : f32 to vector<2x8x49xf32>
    %35 = arith.maximumf %33, %34 : vector<2x8x49xf32>
    %c0_10 = arith.constant 0 : index
    %c0_11 = arith.constant 0 : index
    %36 = vector.load %arg4[%c0_10, %c0_11] : memref<24x8xf32, #tpu.memory_space<vmem>>, vector<24x8xf32>
    %37 = vector.shape_cast %36 : vector<24x8xf32> to vector<1x24x8xf32>
    %38 = vector.shape_cast %37 : vector<1x24x8xf32> to vector<1x24x8xf32>
    %39 = vector.broadcast %38 : vector<1x24x8xf32> to vector<2x24x8xf32>
    "tpu.trace_start"() <{level = 10 : i32, message = "bqi,bil->bql"}> : () -> ()
    %cst_12 = arith.constant dense<0.000000e+00> : vector<2x24x49xf32>
    %40 = tpu.matmul %39, %35, %cst_12 {dimension_numbers = #tpu.dot_dimension_numbers<[2], [1], [1], [2], [0, 0, 0, 1, 1, 2], [0], [0]>} : vector<2x24x8xf32>, vector<2x8x49xf32>, vector<2x24x49xf32> -> vector<2x24x49xf32>
    "tpu.trace_stop"() : () -> ()
    %c0_13 = arith.constant 0 : index
    %c384 = arith.constant 384 : index
    %41 = vector.load %arg2[%c0_13, %c384] : memref<98x528xf32, #tpu.memory_space<vmem>>, vector<49x144xf32>
    %42 = vector.shape_cast %40 : vector<2x24x49xf32> to vector<48x49xf32>
    %cst_14 = arith.constant dense<0.000000e+00> : vector<48x144xf32>
    %43 = tpu.matmul %42, %41, %cst_14 {dimension_numbers = #tpu.dot_dimension_numbers<[1], [0], [0], [1], [0, 0, 1, 1], [], []>} : vector<48x49xf32>, vector<49x144xf32>, vector<48x144xf32> -> vector<48x144xf32>
    %44 = vector.shape_cast %43 : vector<48x144xf32> to vector<2x3x8x144xf32>
    %45 = vector.extract_strided_slice %44 {offsets = [0, 0, 0, 0], sizes = [2, 1, 8, 48], strides = [1, 1, 1, 1]} : vector<2x3x8x144xf32> to vector<2x1x8x48xf32>
    %46 = vector.shape_cast %45 : vector<2x1x8x48xf32> to vector<2x8x48xf32>
    %47 = vector.extract_strided_slice %44 {offsets = [0, 1, 0, 48], sizes = [2, 1, 8, 48], strides = [1, 1, 1, 1]} : vector<2x3x8x144xf32> to vector<2x1x8x48xf32>
    %48 = vector.shape_cast %47 : vector<2x1x8x48xf32> to vector<2x8x48xf32>
    %49 = arith.addf %46, %48 : vector<2x8x48xf32>
    %50 = vector.extract_strided_slice %44 {offsets = [0, 2, 0, 96], sizes = [2, 1, 8, 48], strides = [1, 1, 1, 1]} : vector<2x3x8x144xf32> to vector<2x1x8x48xf32>
    %51 = vector.shape_cast %50 : vector<2x1x8x48xf32> to vector<2x8x48xf32>
    %52 = arith.addf %49, %51 : vector<2x8x48xf32>
    %c0_15 = arith.constant 0 : index
    %c4 = arith.constant 4 : index
    %53 = vector.load %arg3[%c0_15, %c4] : memref<8x41xf32, #tpu.memory_space<vmem>>, vector<8x1xf32>
    %54 = vector.extract_strided_slice %52 {offsets = [0, 0, 0], sizes = [2, 8, 24], strides = [1, 1, 1]} : vector<2x8x48xf32> to vector<2x8x24xf32>
    %55 = vector.extract_strided_slice %52 {offsets = [0, 0, 24], sizes = [2, 8, 24], strides = [1, 1, 1]} : vector<2x8x48xf32> to vector<2x8x24xf32>
    %56 = arith.maximumf %54, %55 : vector<2x8x24xf32>
    %57 = vector.shape_cast %53 : vector<8x1xf32> to vector<1x8x1xf32>
    %58 = vector.broadcast %57 : vector<1x8x1xf32> to vector<2x8x24xf32>
    %59 = arith.addf %56, %58 : vector<2x8x24xf32>
    %cst_16 = arith.constant 0.000000e+00 : f32
    %60 = vector.broadcast %cst_16 : f32 to vector<2x8x24xf32>
    %61 = arith.maximumf %59, %60 : vector<2x8x24xf32>
    %c0_17 = arith.constant 0 : index
    %c0_18 = arith.constant 0 : index
    %62 = vector.load %arg5[%c0_17, %c0_18] : memref<32x260xf32, #tpu.memory_space<vmem>>, vector<24x256xf32>
    %63 = vector.shape_cast %61 : vector<2x8x24xf32> to vector<16x24xf32>
    %cst_19 = arith.constant dense<0.000000e+00> : vector<16x256xf32>
    %64 = tpu.matmul %63, %62, %cst_19 {dimension_numbers = #tpu.dot_dimension_numbers<[1], [0], [0], [1], [0, 0, 1, 1], [], []>} : vector<16x24xf32>, vector<24x256xf32>, vector<16x256xf32> -> vector<16x256xf32>
    %65 = vector.shape_cast %64 : vector<16x256xf32> to vector<2x8x256xf32>
    %66 = vector.extract_strided_slice %65 {offsets = [0, 0, 0], sizes = [2, 1, 32], strides = [1, 1, 1]} : vector<2x8x256xf32> to vector<2x1x32xf32>
    %67 = vector.shape_cast %66 : vector<2x1x32xf32> to vector<2x32xf32>
    %68 = vector.extract_strided_slice %65 {offsets = [0, 1, 32], sizes = [2, 1, 32], strides = [1, 1, 1]} : vector<2x8x256xf32> to vector<2x1x32xf32>
    %69 = vector.shape_cast %68 : vector<2x1x32xf32> to vector<2x32xf32>
    %70 = arith.addf %67, %69 : vector<2x32xf32>
    %71 = vector.extract_strided_slice %65 {offsets = [0, 2, 64], sizes = [2, 1, 32], strides = [1, 1, 1]} : vector<2x8x256xf32> to vector<2x1x32xf32>
    %72 = vector.shape_cast %71 : vector<2x1x32xf32> to vector<2x32xf32>
    %73 = arith.addf %70, %72 : vector<2x32xf32>
    %74 = vector.extract_strided_slice %65 {offsets = [0, 3, 96], sizes = [2, 1, 32], strides = [1, 1, 1]} : vector<2x8x256xf32> to vector<2x1x32xf32>
    %75 = vector.shape_cast %74 : vector<2x1x32xf32> to vector<2x32xf32>
    %76 = arith.addf %73, %75 : vector<2x32xf32>
    %77 = vector.extract_strided_slice %65 {offsets = [0, 4, 128], sizes = [2, 1, 32], strides = [1, 1, 1]} : vector<2x8x256xf32> to vector<2x1x32xf32>
    %78 = vector.shape_cast %77 : vector<2x1x32xf32> to vector<2x32xf32>
    %79 = arith.addf %76, %78 : vector<2x32xf32>
    %80 = vector.extract_strided_slice %65 {offsets = [0, 5, 160], sizes = [2, 1, 32], strides = [1, 1, 1]} : vector<2x8x256xf32> to vector<2x1x32xf32>
    %81 = vector.shape_cast %80 : vector<2x1x32xf32> to vector<2x32xf32>
    %82 = arith.addf %79, %81 : vector<2x32xf32>
    %83 = vector.extract_strided_slice %65 {offsets = [0, 6, 192], sizes = [2, 1, 32], strides = [1, 1, 1]} : vector<2x8x256xf32> to vector<2x1x32xf32>
    %84 = vector.shape_cast %83 : vector<2x1x32xf32> to vector<2x32xf32>
    %85 = arith.addf %82, %84 : vector<2x32xf32>
    %86 = vector.extract_strided_slice %65 {offsets = [0, 7, 224], sizes = [2, 1, 32], strides = [1, 1, 1]} : vector<2x8x256xf32> to vector<2x1x32xf32>
    %87 = vector.shape_cast %86 : vector<2x1x32xf32> to vector<2x32xf32>
    %88 = arith.addf %85, %87 : vector<2x32xf32>
    %c0_20 = arith.constant 0 : index
    %c5 = arith.constant 5 : index
    %89 = vector.load %arg3[%c0_20, %c5] : memref<8x41xf32, #tpu.memory_space<vmem>>, vector<1x32xf32>
    %90 = vector.broadcast %89 : vector<1x32xf32> to vector<2x32xf32>
    %91 = arith.addf %88, %90 : vector<2x32xf32>
    %cst_21 = arith.constant 0.000000e+00 : f32
    %92 = vector.broadcast %cst_21 : f32 to vector<2x32xf32>
    %93 = arith.maximumf %91, %92 : vector<2x32xf32>
    %c0_22 = arith.constant 0 : index
    %c256 = arith.constant 256 : index
    %94 = vector.load %arg5[%c0_22, %c256] : memref<32x260xf32, #tpu.memory_space<vmem>>, vector<32x4xf32>
    %c0_23 = arith.constant 0 : index
    %c37 = arith.constant 37 : index
    %95 = vector.load %arg3[%c0_23, %c37] : memref<8x41xf32, #tpu.memory_space<vmem>>, vector<1x4xf32>
    %cst_24 = arith.constant dense<0.000000e+00> : vector<2x4xf32>
    %96 = tpu.matmul %93, %94, %cst_24 {dimension_numbers = #tpu.dot_dimension_numbers<[1], [0], [0], [1], [0, 0, 1, 1], [], []>} : vector<2x32xf32>, vector<32x4xf32>, vector<2x4xf32> -> vector<2x4xf32>
    %97 = vector.broadcast %95 : vector<1x4xf32> to vector<2x4xf32>
    %98 = arith.addf %96, %97 : vector<2x4xf32>
    %cst_25 = arith.constant dense<0xFF800000> : vector<2xf32>
    %99 = vector.multi_reduction <maximumf>, %98, %cst_25 [1] : vector<2x4xf32> to vector<2xf32>
    %100 = vector.shape_cast %99 : vector<2xf32> to vector<2x1xf32>
    %101 = vector.broadcast %100 : vector<2x1xf32> to vector<2x4xf32>
    %102 = arith.subf %98, %101 : vector<2x4xf32>
    %103 = math.exp %102 : vector<2x4xf32>
    %cst_26 = arith.constant dense<0.000000e+00> : vector<2xf32>
    %104 = vector.multi_reduction <add>, %103, %cst_26 [1] : vector<2x4xf32> to vector<2xf32>
    %105 = vector.shape_cast %104 : vector<2xf32> to vector<2x1xf32>
    %106 = math.log %105 : vector<2x1xf32>
    %107 = arith.addf %106, %100 : vector<2x1xf32>
    %108 = vector.broadcast %107 : vector<2x1xf32> to vector<2x4xf32>
    %109 = arith.subf %98, %108 : vector<2x4xf32>
    %c0_27 = arith.constant 0 : index
    %c0_28 = arith.constant 0 : index
    %110 = vector.load %arg6[%c0_27, %c0_28] : memref<2x4xf32, #tpu.memory_space<vmem>>, vector<2x4xf32>
    tpu.vector_store %arg6[%c0_27, %c0_28], %109 {strides = array<i32>} : memref<2x4xf32, #tpu.memory_space<vmem>>, vector<2x4xf32>,
    return
  }
  func.func @transform_0(%arg0: i32) -> (i32, i32, i32) {
    %c0_i32 = arith.constant 0 : i32
    %c0_i32_0 = arith.constant 0 : i32
    %c0_i32_1 = arith.constant 0 : i32
    return %arg0, %c0_i32, %c0_i32_0 : i32, i32, i32
  }
  func.func @transform_1(%arg0: i32) -> (i32, i32) {
    %c0_i32 = arith.constant 0 : i32
    %c0_i32_0 = arith.constant 0 : i32
    %c0_i32_1 = arith.constant 0 : i32
    return %c0_i32, %c0_i32_0 : i32, i32
  }
  func.func @transform_2(%arg0: i32) -> (i32, i32) {
    %c0_i32 = arith.constant 0 : i32
    %c0_i32_0 = arith.constant 0 : i32
    %c0_i32_1 = arith.constant 0 : i32
    return %c0_i32, %c0_i32_0 : i32, i32
  }
  func.func @transform_3(%arg0: i32) -> (i32, i32) {
    %c0_i32 = arith.constant 0 : i32
    %c0_i32_0 = arith.constant 0 : i32
    %c0_i32_1 = arith.constant 0 : i32
    return %c0_i32, %c0_i32_0 : i32, i32
  }
  func.func @transform_4(%arg0: i32) -> (i32, i32) {
    %c0_i32 = arith.constant 0 : i32
    %c0_i32_0 = arith.constant 0 : i32
    %c0_i32_1 = arith.constant 0 : i32
    return %c0_i32, %c0_i32_0 : i32, i32
  }
  func.func @transform_5(%arg0: i32) -> (i32, i32) {
    %c0_i32 = arith.constant 0 : i32
    %c0_i32_0 = arith.constant 0 : i32
    return %arg0, %c0_i32 : i32, i32
  }
}

</mosaic_0001>

<llo_original>
// kernel: montage_forward.1
$region0: #{montage_forward.1}
  #allocation0 [shape = 'u32[]', space=smem, size = 0x4, offset = 0x4, fixed_abs, tag = 'smem constant byte address 0x4 - core index']
  #allocation1 [shape = 'u32[144,128]{1,0:T(1,128)}', space=vmem, size = 0x12000, scoped, tag = 'internal scratch']
  %s0 = inlined_call_operand.vmem [shape: f32[2,1,98], index: 0, kind: input, shape index: {}]
  %s1 = inlined_call_operand.vmem [shape: f32[98,528], index: 1, kind: input, shape index: {}]
  %s2 = inlined_call_operand.vmem [shape: f32[8,41], index: 2, kind: input, shape index: {}]
  %s3 = inlined_call_operand.vmem [shape: f32[24,8], index: 3, kind: input, shape index: {}]
  %s4 = inlined_call_operand.vmem [shape: f32[32,260], index: 4, kind: input, shape index: {}]
  %s5 = inlined_call_operand.hbm [shape: f32[2,4], index: 5, kind: output, shape index: {}]
  %s6 = sld [smem:[#allocation0]]
  $region30: #{montage_forward.1} parent=0
    _
  %s8 = ssub.s32 1, %s6
  %s9 = scalar_select 0, %s8, %s6
  $region1: #{montage_forward.1} parent=0
    #allocation2 [shape = 'u8[1024]{0}', space=vmem, size = 0x400, scoped, tag = 'output window, operand 0, single buffered']
    #allocation3 [shape = 's32[1]{0}', space=sflag, size = 0x4, scoped, tag = 'scoped memory for montage_forward.1']
    %10 = vsyncpa [#allocation3], 0
    // Predicated region
    $region2: #{montage_forward.1} parent=1 // pred_check
      _
    $region3: #{montage_forward.1} parent=1 // pred_check_branch
      %12 = sbr.rel (0) target = $region5
    $region4: #{montage_forward.1} parent=1 // pred_region
      _
    $region5: #{montage_forward.1} parent=1 // pred_fallthru
      _
    // Predicated region
    $region6: #{montage_forward.1} parent=1 // pred_check
      _
    $region7: #{montage_forward.1} parent=1 // pred_check_branch
      %14 = sbr.rel (0) target = $region9
    $region8: #{montage_forward.1} parent=1 // pred_region
      _
    $region9: #{montage_forward.1} parent=1 // pred_fallthru
      _
    // Predicated region
    $region10: #{montage_forward.1} parent=1 // pred_check
      _
    $region11: #{montage_forward.1} parent=1 // pred_check_branch
      %16 = sbr.rel (0) target = $region13
    $region12: #{montage_forward.1} parent=1 // pred_region
      _
    $region13: #{montage_forward.1} parent=1 // pred_fallthru
      _
    // Predicated region
    $region14: #{montage_forward.1} parent=1 // pred_check
      _
    $region15: #{montage_forward.1} parent=1 // pred_check_branch
      %18 = sbr.rel (0) target = $region17
    $region16: #{montage_forward.1} parent=1 // pred_region
      _
    $region17: #{montage_forward.1} parent=1 // pred_fallthru
      _
    // Predicated region
    $region18: #{montage_forward.1} parent=1 // pred_check
      _
    $region19: #{montage_forward.1} parent=1 // pred_check_branch
      %20 = sbr.rel (0) target = $region21
    $region20: #{montage_forward.1} parent=1 // pred_region
      _
    $region21: #{montage_forward.1} parent=1 // pred_fallthru
      _
    %v21 = vld [vmem:[%s0] sm:$0x1]
    %v22 = vld [vmem:[%s0 + $0x1] sm:$0x1]
    %v23 = vld [vmem:[%s1] sm:$0xff]
    %v24 = vld [vmem:[%s1 + $0x8] sm:$0xff]
    %v25 = vld [vmem:[%s1 + $0x10] sm:$0xff]
    %v26 = vld [vmem:[%s1 + $0x28] sm:$0xff]
    %v27 = vld [vmem:[%s1 + $0x30] sm:$0xff]
    %v28 = vld [vmem:[%s1 + $0x38] sm:$0xff]
    %v29 = vld [vmem:[%s1 + $0x50] sm:$0xff]
    %v30 = vld [vmem:[%s1 + $0x58] sm:$0xff]
    %v31 = vld [vmem:[%s1 + $0x60] sm:$0xff]
    %v32 = vld [vmem:[%s1 + $0x78] sm:$0xff]
    %v33 = vld [vmem:[%s1 + $0x80] sm:$0xff]
    %v34 = vld [vmem:[%s1 + $0x88] sm:$0xff]
    %v35 = vld [vmem:[%s1 + $0xa0] sm:$0xff]
    %v36 = vld [vmem:[%s1 + $0xa8] sm:$0xff]
    %v37 = vld [vmem:[%s1 + $0xb0] sm:$0xff]
    %v38 = vld [vmem:[%s1 + $0xc8] sm:$0xff]
    %v39 = vld [vmem:[%s1 + $0xd0] sm:$0xff]
    %v40 = vld [vmem:[%s1 + $0xd8] sm:$0xff]
    %v41 = vld [vmem:[%s1 + $0xf0] sm:$0xff]
    %v42 = vld [vmem:[%s1 + $0xf8] sm:$0xff]
    %v43 = vld [vmem:[%s1 + $0x100] sm:$0xff]
    %v44 = vld [vmem:[%s1 + $0x118] sm:$0xff]
    %v45 = vld [vmem:[%s1 + $0x120] sm:$0xff]
    %v46 = vld [vmem:[%s1 + $0x128] sm:$0xff]
    %v47 = vld [vmem:[%s1 + $0x140] sm:$0xff]
    %v48 = vld [vmem:[%s1 + $0x148] sm:$0xff]
    %v49 = vld [vmem:[%s1 + $0x150] sm:$0xff]
    %v50 = vld [vmem:[%s1 + $0x168] sm:$0xff]
    %v51 = vld [vmem:[%s1 + $0x170] sm:$0xff]
    %v52 = vld [vmem:[%s1 + $0x178] sm:$0xff]
    %v53 = vld [vmem:[%s1 + $0x190] sm:$0xff]
    %v54 = vld [vmem:[%s1 + $0x198] sm:$0xff]
    %v55 = vld [vmem:[%s1 + $0x1a0] sm:$0xff]
    %v56 = vld [vmem:[%s1 + $0x1b8] sm:$0xff]
    %v57 = vld [vmem:[%s1 + $0x1c0] sm:$0xff]
    %v58 = vld [vmem:[%s1 + $0x1c8] sm:$0xff]
    %v59 = vld [vmem:[%s1 + $0x1e0] sm:$0x3]
    %v60 = vld [vmem:[%s1 + $0x1e8] sm:$0x3]
    %v61 = vld [vmem:[%s1 + $0x1f0] sm:$0x3]
    %v64 = vcombine.low %v21, %v22
    %v66 = vunpack.c.l.s4 1966171168
    %v67 = vunpack.c.0.s8 %v66
    %v68 = vlaneseq
    %v69 = vshrl.u32 %v68, 7
    %v70 = vsub.s32 %v67, %v69
    %v71 = vrot.slane %v64, %v70
    %v73 = vunpack.c.l.s4 1966171168
    %v74 = vunpack.c.0.s8 %v73
    %v75 = vlaneseq
    %v76 = vshrl.u32 %v75, 7
    %v77 = vsub.s32 %v74, %v76
    %v78 = vrot.slane %v71, %v77
    %vm79 = vcmask 801792
    %v80 = vsel %vm79, %v78, 0
    %vm82 = vcmask 1041408
    %v84 = vsel %vm82, %v59, 0
    %v87 = vsel %vm82, %v60, 0
    %v90 = vsel %vm82, %v61, 0
    %92 = vmatprep.subr.mxu0 %v24
    %93 = vmatpush1.msra.mxu0 %v23
    %94 = vmatprep.subr.mxu0 %v27
    %95 = vmatpush1.msra.mxu0 %v26
    %96 = vmatprep.subr.mxu0 %v30
    %97 = vmatpush1.msra.mxu0 %v29
    %98 = vmatprep.subr.mxu0 %v33
    %99 = vmatpush1.msra.mxu0 %v32
    %100 = vmatprep.subr.mxu0 %v36
    %101 = vmatpush1.msra.mxu0 %v35
    %102 = vmatprep.subr.mxu0 %v39
    %103 = vmatpush1.msra.mxu0 %v38
    %104 = vmatprep.subr.mxu0 %v42
    %105 = vmatpush1.msra.mxu0 %v41
    %106 = vmatprep.subr.mxu0 %v45
    %107 = vmatpush1.msra.mxu0 %v44
    %108 = vmatprep.subr.mxu0 %v48
    %109 = vmatpush1.msra.mxu0 %v47
    %110 = vmatprep.subr.mxu0 %v51
    %111 = vmatpush1.msra.mxu0 %v50
    %112 = vmatprep.subr.mxu0 %v54
    %113 = vmatpush1.msra.mxu0 %v53
    %114 = vmatprep.subr.mxu0 %v57
    %115 = vmatpush1.msra.mxu0 %v56
    %116 = vmatprep.subr.mxu0 %v87
    %117 = vmatpush1.msra.mxu0 %v84
    %118 = vmatprep.subr.mxu0 0.0
    %119 = vmatpush1.msra.mxu0 0.0
    %120 = vmatprep.subr.mxu0 0.0
    %121 = vmatpush1.msra.mxu0 0.0
    %122 = vmatprep.subr.mxu0 0.0
    %123 = vmatpush1.msra.mxu0 0.0
    %124 = vmatprep.subr.mxu0 0.0
    %125 = vmatpush1.msra.mxu0 0.0
    %126 = vmatprep.subr.mxu0 0.0
    %127 = vmatpush1.msra.mxu0 0.0
    %128 = vmatprep.subr.mxu0 0.0
    %129 = vmatpush1.msra.mxu0 0.0
    %130 = vmatprep.subr.mxu0 0.0
    %131 = vmatpush1.msra.mxu0 0.0
    %132 = vmatprep.subr.mxu0 0.0
    %133 = vmatpush1.msra.mxu0 0.0
    %134 = vmatprep.subr.mxu0 0.0
    %135 = vmatpush1.msra.mxu0 0.0
    %136 = vmatprep.subr.mxu0 0.0
    %137 = vmatpush1.msra.mxu0 0.0
    %138 = vmatprep.subr.mxu0 0.0
    %139 = vmatpush1.msra.mxu0 0.0
    %140 = vmatprep.subr.mxu0 0.0
    %141 = vmatpush1.msra.mxu0 0.0
    %142 = vmatprep.subr.mxu0 0.0
    %143 = vmatpush1.msra.mxu0 0.0
    %144 = vmatprep.subr.mxu0 0.0
    %145 = vmatpush1.msra.mxu0 0.0
    %146 = vmatprep.subr.mxu0 0.0
    %147 = vmatpush1.msra.mxu0 0.0
    %148 = vmatprep.subr.mxu0 0.0
    %149 = vmatpush1.msra.mxu0 0.0
    %150 = vmatprep.subr.mxu0 0.0
    %151 = vmatpush1.msra.mxu0 0.0
    %152 = vmatprep.subr.mxu0 0.0
    %153 = vmatpush1.msra.mxu0 0.0
    %154 = vmatprep.subr.mxu0 0.0
    %155 = vmatpush1.msra.mxu0 0.0
    %156 = vmatprep.mubr.f32.mxu0 0.0
    %157 = vmatmul.mubr.f32.gmra.mrb[0].mxu0 %v80
    %v158 = vpop.f32.mrb[0].mxu0
    %v159 = vadd.f32 0.0, %v158
    %v160 = vpop.f32.mrb[0].mxu0
    %v161 = vadd.f32 0.0, %v160
    %162 = vdwg.mxu0
    %163 = vmatprep.subr.mxu0 0.0
    %164 = vmatpush1.msra.mxu0 %v25
    %165 = vmatprep.subr.mxu0 0.0
    %166 = vmatpush1.msra.mxu0 %v28
    %167 = vmatprep.subr.mxu0 0.0
    %168 = vmatpush1.msra.mxu0 %v31
    %169 = vmatprep.subr.mxu0 0.0
    %170 = vmatpush1.msra.mxu0 %v34
    %171 = vmatprep.subr.mxu0 0.0
    %172 = vmatpush1.msra.mxu0 %v37
    %173 = vmatprep.subr.mxu0 0.0
    %174 = vmatpush1.msra.mxu0 %v40
    %175 = vmatprep.subr.mxu0 0.0
    %176 = vmatpush1.msra.mxu0 %v43
    %177 = vmatprep.subr.mxu0 0.0
    %178 = vmatpush1.msra.mxu0 %v46
    %179 = vmatprep.subr.mxu0 0.0
    %180 = vmatpush1.msra.mxu0 %v49
    %181 = vmatprep.subr.mxu0 0.0
    %182 = vmatpush1.msra.mxu0 %v52
    %183 = vmatprep.subr.mxu0 0.0
    %184 = vmatpush1.msra.mxu0 %v55
    %185 = vmatprep.subr.mxu0 0.0
    %186 = vmatpush1.msra.mxu0 %v58
    %187 = vmatprep.subr.mxu0 0.0
    %188 = vmatpush1.msra.mxu0 %v90
    %189 = vmatprep.subr.mxu0 0.0
    %190 = vmatpush1.msra.mxu0 0.0
    %191 = vmatprep.subr.mxu0 0.0
    %192 = vmatpush1.msra.mxu0 0.0
    %193 = vmatprep.subr.mxu0 0.0
    %194 = vmatpush1.msra.mxu0 0.0
    %195 = vmatprep.subr.mxu0 0.0
    %196 = vmatpush1.msra.mxu0 0.0
    %197 = vmatprep.subr.mxu0 0.0
    %198 = vmatpush1.msra.mxu0 0.0
    %199 = vmatprep.subr.mxu0 0.0
    %200 = vmatpush1.msra.mxu0 0.0
    %201 = vmatprep.subr.mxu0 0.0
    %202 = vmatpush1.msra.mxu0 0.0
    %203 = vmatprep.subr.mxu0 0.0
    %204 = vmatpush1.msra.mxu0 0.0
    %205 = vmatprep.subr.mxu0 0.0
    %206 = vmatpush1.msra.mxu0 0.0
    %207 = vmatprep.subr.mxu0 0.0
    %208 = vmatpush1.msra.mxu0 0.0
    %209 = vmatprep.subr.mxu0 0.0
    %210 = vmatpush1.msra.mxu0 0.0
    %211 = vmatprep.subr.mxu0 0.0
    %212 = vmatpush1.msra.mxu0 0.0
    %213 = vmatprep.subr.mxu0 0.0
    %214 = vmatpush1.msra.mxu0 0.0
    %215 = vmatprep.subr.mxu0 0.0
    %216 = vmatpush1.msra.mxu0 0.0
    %217 = vmatprep.subr.mxu0 0.0
    %218 = vmatpush1.msra.mxu0 0.0
    %219 = vmatprep.subr.mxu0 0.0
    %220 = vmatpush1.msra.mxu0 0.0
    %221 = vmatprep.subr.mxu0 0.0
    %222 = vmatpush1.msra.mxu0 0.0
    %223 = vmatprep.subr.mxu0 0.0
    %224 = vmatpush1.msra.mxu0 0.0
    %225 = vmatprep.subr.mxu0 0.0
    %226 = vmatpush1.msra.mxu0 0.0
    %227 = vmatprep.mubr.f32.mxu0 0.0
    %228 = vmatmul.mubr.f32.gmra.mrb[0].mxu0 %v80
    %v229 = vpop.f32.mrb[0].mxu0
    %v230 = vadd.f32 0.0, %v229
    %v231 = vpop.f32.mrb[0].mxu0
    %232 = vdwg.mxu0
    %v233 = vld [vmem:[%s2] sm:$0xff]
    %v236 = vunpack.c.l.s4 1966171168
    %v237 = vunpack.c.0.s8 %v236
    %v238 = vlaneseq
    %v239 = vshrl.u32 %v238, 7
    %v240 = vsub.s32 %v237, %v239
    %v241 = vrot.slane %v159, %v240
    %v242 = vcombine.high %v241, %v241
    %v244 = vunpack.c.l.s4 1966171168
    %v245 = vunpack.c.0.s8 %v244
    %v246 = vlaneseq
    %v247 = vshrl.u32 %v246, 7
    %v248 = vsub.s32 %v245, %v247
    %v249 = vrot.slane %v241, %v248
    %v251 = vunpack.c.l.s4 1966171168
    %v252 = vunpack.c.0.s8 %v251
    %v253 = vlaneseq
    %v254 = vshrl.u32 %v253, 7
    %v255 = vsub.s32 %v252, %v254
    %v256 = vrot.slane %v242, %v255
    %258 = vset.pattern.permute.xlu0 0
    %259 = vperm.xlu0 %258, %v233
    %v260 = vpop.permute.xlu0 %259
    %v262 = vlaneseq
    %v263 = vshrl.u32 %v262, 7
    %v264 = vsub.s32 0, %v263
    %v265 = vrot.slane %v249, %v264
    %v266 = vlaneseq
    %v267 = vshrl.u32 %v266, 7
    %v268 = vsub.s32 0, %v267
    %v269 = vrot.slane %v256, %v268
    %v272 = vmul.f32 %v260, %v265
    %v273 = vmul.f32 %v260, %v269
    %v274 = vld [vmem:[%s2] sm:$0xff]
    %v276 = vcombine.low %v159, %v161
    %v278 = vunpack.c.l.s4 1966171168
    %v279 = vunpack.c.0.s8 %v278
    %v280 = vlaneseq
    %v281 = vshrl.u32 %v280, 7
    %v282 = vsub.s32 %v279, %v281
    %v283 = vrot.slane %v276, %v282
    %v284 = vcombine.high %v283, %v283
    %v286 = vunpack.c.l.s4 1966171168
    %v287 = vunpack.c.0.s8 %v286
    %v288 = vlaneseq
    %v289 = vshrl.u32 %v288, 7
    %v290 = vsub.s32 %v287, %v289
    %v291 = vrot.slane %v283, %v290
    %v293 = vunpack.c.l.s4 1966171168
    %v294 = vunpack.c.0.s8 %v293
    %v295 = vlaneseq
    %v296 = vshrl.u32 %v295, 7
    %v297 = vsub.s32 %v294, %v296
    %v298 = vrot.slane %v284, %v297
    %300 = vset.pattern.permute.xlu0 1
    %301 = vperm.xlu0 %300, %v274
    %v302 = vpop.permute.xlu0 %301
    %v304 = vlaneseq
    %v305 = vshrl.u32 %v304, 7
    %v306 = vsub.s32 0, %v305
    %v307 = vrot.slane %v291, %v306
    %v308 = vlaneseq
    %v309 = vshrl.u32 %v308, 7
    %v310 = vsub.s32 1, %v309
    %v311 = vrot.slane %v291, %v310
    %v312 = vlaneseq
    %v313 = vshrl.u32 %v312, 7
    %v314 = vsub.s32 0, %v313
    %v315 = vrot.slane %v298, %v314
    %v316 = vlaneseq
    %v317 = vshrl.u32 %v316, 7
    %v318 = vsub.s32 1, %v317
    %v319 = vrot.slane %v298, %v318
    %v324 = vmul.f32 %v302, %v307
    %v325 = vmul.f32 %v302, %v311
    %v326 = vmul.f32 %v302, %v315
    %v327 = vmul.f32 %v302, %v319
    %332 = vrot.lane.b32.xlu0 %v324, 30
    %v333 = vpop.permute.xlu0 %332
    %334 = vrot.lane.b32.xlu0 %v325, 30
    %v335 = vpop.permute.xlu0 %334
    %336 = vrot.lane.b32.xlu0 %v326, 30
    %v337 = vpop.permute.xlu0 %336
    %338 = vrot.lane.b32.xlu0 %v327, 30
    %v339 = vpop.permute.xlu0 %338
    %vm340 = vcmask 244736
    %v341 = vsel %vm340, %v333, %v335
    %v342 = vsel %vm340, %v337, %v339
    %v345 = vadd.f32 %v272, %v341
    %v346 = vadd.f32 %v273, %v342
    %v347 = vld [vmem:[%s2] sm:$0xff]
    %v349 = vcombine.low %v161, %v230
    %v351 = vunpack.c.l.s4 1966171168
    %v352 = vunpack.c.0.s8 %v351
    %v353 = vlaneseq
    %v354 = vshrl.u32 %v353, 7
    %v355 = vsub.s32 %v352, %v354
    %v356 = vrot.slane %v349, %v355
    %v357 = vcombine.high %v356, %v356
    %v359 = vunpack.c.l.s4 1966171168
    %v360 = vunpack.c.0.s8 %v359
    %v361 = vlaneseq
    %v362 = vshrl.u32 %v361, 7
    %v363 = vsub.s32 %v360, %v362
    %v364 = vrot.slane %v356, %v363
    %v366 = vunpack.c.l.s4 1966171168
    %v367 = vunpack.c.0.s8 %v366
    %v368 = vlaneseq
    %v369 = vshrl.u32 %v368, 7
    %v370 = vsub.s32 %v367, %v369
    %v371 = vrot.slane %v357, %v370
    %373 = vset.pattern.permute.xlu0 2
    %374 = vperm.xlu0 %373, %v347
    %v375 = vpop.permute.xlu0 %374
    %v377 = vlaneseq
    %v378 = vshrl.u32 %v377, 7
    %v379 = vsub.s32 0, %v378
    %v380 = vrot.slane %v364, %v379
    %v381 = vlaneseq
    %v382 = vshrl.u32 %v381, 7
    %v383 = vsub.s32 1, %v382
    %v384 = vrot.slane %v364, %v383
    %v385 = vlaneseq
    %v386 = vshrl.u32 %v385, 7
    %v387 = vsub.s32 0, %v386
    %v388 = vrot.slane %v371, %v387
    %v389 = vlaneseq
    %v390 = vshrl.u32 %v389, 7
    %v391 = vsub.s32 1, %v390
    %v392 = vrot.slane %v371, %v391
    %v397 = vmul.f32 %v375, %v380
    %v398 = vmul.f32 %v375, %v384
    %v399 = vmul.f32 %v375, %v388
    %v400 = vmul.f32 %v375, %v392
    %405 = vrot.lane.b32.xlu0 %v397, 60
    %v406 = vpop.permute.xlu0 %405
    %407 = vrot.lane.b32.xlu0 %v398, 60
    %v408 = vpop.permute.xlu0 %407
    %409 = vrot.lane.b32.xlu0 %v399, 60
    %v410 = vpop.permute.xlu0 %409
    %411 = vrot.lane.b32.xlu0 %v400, 60
    %v412 = vpop.permute.xlu0 %411
    %vm413 = vcmask 490496
    %v414 = vsel %vm413, %v406, %v408
    %v415 = vsel %vm413, %v410, %v412
    %v418 = vadd.f32 %v345, %v414
    %v419 = vadd.f32 %v346, %v415
    %v420 = vld [vmem:[%s2] sm:$0xff]
    %423 = vrot.lane.b32.xlu0 %v418, 79
    %v424 = vpop.permute.xlu0 %423
    %425 = vrot.lane.b32.xlu0 %v419, 79
    %v426 = vpop.permute.xlu0 %425
    %v429 = vmax.f32 %v418, %v424
    %v430 = vmax.f32 %v419, %v426
    %432 = vset.pattern.permute.xlu0 3
    %433 = vperm.xlu0 %432, %v420
    %v434 = vpop.permute.xlu0 %433
    %v436 = vadd.f32 %v429, %v434
    %v437 = vadd.f32 %v430, %v434
    %v438 = vmax.f32 %v436, 0.0
    %v439 = vmax.f32 %v437, 0.0
    %v440 = vld [vmem:[%s3] sm:$0xff]
    %v441 = vld [vmem:[%s3 + $0x8] sm:$0xff]
    %v442 = vld [vmem:[%s3 + $0x10] sm:$0xff]
    %vm443 = vcmask 64512
    %v445 = vsel %vm443, %v440, 0
    %v448 = vsel %vm443, %v441, 0
    %v451 = vsel %vm443, %v442, 0
    %453 = vmatprep.subr.mxu0 0.0
    %454 = vmatpush1.msra.mxu0 %v438
    %455 = vmatprep.subr.mxu0 0.0
    %456 = vmatpush1.msra.mxu0 0.0
    %457 = vmatprep.subr.mxu0 0.0
    %458 = vmatpush1.msra.mxu0 0.0
    %459 = vmatprep.subr.mxu0 0.0
    %460 = vmatpush1.msra.mxu0 0.0
    %461 = vmatprep.subr.mxu0 0.0
    %462 = vmatpush1.msra.mxu0 0.0
    %463 = vmatprep.subr.mxu0 0.0
    %464 = vmatpush1.msra.mxu0 0.0
    %465 = vmatprep.subr.mxu0 0.0
    %466 = vmatpush1.msra.mxu0 0.0
    %467 = vmatprep.subr.mxu0 0.0
    %468 = vmatpush1.msra.mxu0 0.0
    %469 = vmatprep.subr.mxu0 0.0
    %470 = vmatpush1.msra.mxu0 0.0
    %471 = vmatprep.subr.mxu0 0.0
    %472 = vmatpush1.msra.mxu0 0.0
    %473 = vmatprep.subr.mxu0 0.0
    %474 = vmatpush1.msra.mxu0 0.0
    %475 = vmatprep.subr.mxu0 0.0
    %476 = vmatpush1.msra.mxu0 0.0
    %477 = vmatprep.subr.mxu0 0.0
    %478 = vmatpush1.msra.mxu0 0.0
    %479 = vmatprep.subr.mxu0 0.0
    %480 = vmatpush1.msra.mxu0 0.0
    %481 = vmatprep.subr.mxu0 0.0
    %482 = vmatpush1.msra.mxu0 0.0
    %483 = vmatprep.subr.mxu0 0.0
    %484 = vmatpush1.msra.mxu0 0.0
    %485 = vmatprep.subr.mxu0 0.0
    %486 = vmatpush1.msra.mxu0 0.0
    %487 = vmatprep.subr.mxu0 0.0
    %488 = vmatpush1.msra.mxu0 0.0
    %489 = vmatprep.subr.mxu0 0.0
    %490 = vmatpush1.msra.mxu0 0.0
    %491 = vmatprep.subr.mxu0 0.0
    %492 = vmatpush1.msra.mxu0 0.0
    %493 = vmatprep.subr.mxu0 0.0
    %494 = vmatpush1.msra.mxu0 0.0
    %495 = vmatprep.subr.mxu0 0.0
    %496 = vmatpush1.msra.mxu0 0.0
    %497 = vmatprep.subr.mxu0 0.0
    %498 = vmatpush1.msra.mxu0 0.0
    %499 = vmatprep.subr.mxu0 0.0
    %500 = vmatpush1.msra.mxu0 0.0
    %501 = vmatprep.subr.mxu0 0.0
    %502 = vmatpush1.msra.mxu0 0.0
    %503 = vmatprep.subr.mxu0 0.0
    %504 = vmatpush1.msra.mxu0 0.0
    %505 = vmatprep.subr.mxu0 0.0
    %506 = vmatpush1.msra.mxu0 0.0
    %507 = vmatprep.subr.mxu0 0.0
    %508 = vmatpush1.msra.mxu0 0.0
    %509 = vmatprep.subr.mxu0 0.0
    %510 = vmatpush1.msra.mxu0 0.0
    %511 = vmatprep.subr.mxu0 0.0
    %512 = vmatpush1.msra.mxu0 0.0
    %513 = vmatprep.subr.mxu0 0.0
    %514 = vmatpush1.msra.mxu0 0.0
    %515 = vmatprep.subr.mxu0 0.0
    %516 = vmatpush1.msra.mxu0 0.0
    %517 = vmatprep.mubr.f32.mxu0 0.0
    %518 = vmatmul.mubr.f32.gmra.mrb[0].mxu0 %v445
    %v519 = vpop.f32.mrb[0].mxu0
    %v520 = vadd.f32 0.0, %v519
    %v521 = vpop.f32.mrb[0].mxu0
    %522 = vmatprep.mubr.f32.mxu0 0.0
    %523 = vmatmul.mubr.f32.gmra.mrb[0].mxu0 %v448
    %v524 = vpop.f32.mrb[0].mxu0
    %v525 = vadd.f32 0.0, %v524
    %v526 = vpop.f32.mrb[0].mxu0
    %527 = vmatprep.mubr.f32.mxu0 0.0
    %528 = vmatmul.mubr.f32.gmra.mrb[0].mxu0 %v451
    %v529 = vpop.f32.mrb[0].mxu0
    %v530 = vadd.f32 0.0, %v529
    %v531 = vpop.f32.mrb[0].mxu0
    %532 = vdwg.mxu0
    %533 = vmatprep.subr.mxu0 0.0
    %534 = vmatpush1.msra.mxu0 %v439
    %535 = vmatprep.subr.mxu0 0.0
    %536 = vmatpush1.msra.mxu0 0.0
    %537 = vmatprep.subr.mxu0 0.0
    %538 = vmatpush1.msra.mxu0 0.0
    %539 = vmatprep.subr.mxu0 0.0
    %540 = vmatpush1.msra.mxu0 0.0
    %541 = vmatprep.subr.mxu0 0.0
    %542 = vmatpush1.msra.mxu0 0.0
    %543 = vmatprep.subr.mxu0 0.0
    %544 = vmatpush1.msra.mxu0 0.0
    %545 = vmatprep.subr.mxu0 0.0
    %546 = vmatpush1.msra.mxu0 0.0
    %547 = vmatprep.subr.mxu0 0.0
    %548 = vmatpush1.msra.mxu0 0.0
    %549 = vmatprep.subr.mxu0 0.0
    %550 = vmatpush1.msra.mxu0 0.0
    %551 = vmatprep.subr.mxu0 0.0
    %552 = vmatpush1.msra.mxu0 0.0
    %553 = vmatprep.subr.mxu0 0.0
    %554 = vmatpush1.msra.mxu0 0.0
    %555 = vmatprep.subr.mxu0 0.0
    %556 = vmatpush1.msra.mxu0 0.0
    %557 = vmatprep.subr.mxu0 0.0
    %558 = vmatpush1.msra.mxu0 0.0
    %559 = vmatprep.subr.mxu0 0.0
    %560 = vmatpush1.msra.mxu0 0.0
    %561 = vmatprep.subr.mxu0 0.0
    %562 = vmatpush1.msra.mxu0 0.0
    %563 = vmatprep.subr.mxu0 0.0
    %564 = vmatpush1.msra.mxu0 0.0
    %565 = vmatprep.subr.mxu0 0.0
    %566 = vmatpush1.msra.mxu0 0.0
    %567 = vmatprep.subr.mxu0 0.0
    %568 = vmatpush1.msra.mxu0 0.0
    %569 = vmatprep.subr.mxu0 0.0
    %570 = vmatpush1.msra.mxu0 0.0
    %571 = vmatprep.subr.mxu0 0.0
    %572 = vmatpush1.msra.mxu0 0.0
    %573 = vmatprep.subr.mxu0 0.0
    %574 = vmatpush1.msra.mxu0 0.0
    %575 = vmatprep.subr.mxu0 0.0
    %576 = vmatpush1.msra.mxu0 0.0
    %577 = vmatprep.subr.mxu0 0.0
    %578 = vmatpush1.msra.mxu0 0.0
    %579 = vmatprep.subr.mxu0 0.0
    %580 = vmatpush1.msra.mxu0 0.0
    %581 = vmatprep.subr.mxu0 0.0
    %582 = vmatpush1.msra.mxu0 0.0
    %583 = vmatprep.subr.mxu0 0.0
    %584 = vmatpush1.msra.mxu0 0.0
    %585 = vmatprep.subr.mxu0 0.0
    %586 = vmatpush1.msra.mxu0 0.0
    %587 = vmatprep.subr.mxu0 0.0
    %588 = vmatpush1.msra.mxu0 0.0
    %589 = vmatprep.subr.mxu0 0.0
    %590 = vmatpush1.msra.mxu0 0.0
    %591 = vmatprep.subr.mxu0 0.0
    %592 = vmatpush1.msra.mxu0 0.0
    %593 = vmatprep.subr.mxu0 0.0
    %594 = vmatpush1.msra.mxu0 0.0
    %595 = vmatprep.subr.mxu0 0.0
    %596 = vmatpush1.msra.mxu0 0.0
    %597 = vmatprep.mubr.f32.mxu0 0.0
    %598 = vmatmul.mubr.f32.gmra.mrb[0].mxu0 %v445
    %v599 = vpop.f32.mrb[0].mxu0
    %v600 = vadd.f32 0.0, %v599
    %v601 = vpop.f32.mrb[0].mxu0
    %602 = vmatprep.mubr.f32.mxu0 0.0
    %603 = vmatmul.mubr.f32.gmra.mrb[0].mxu0 %v448
    %v604 = vpop.f32.mrb[0].mxu0
    %v605 = vadd.f32 0.0, %v604
    %v606 = vpop.f32.mrb[0].mxu0
    %607 = vmatprep.mubr.f32.mxu0 0.0
    %608 = vmatmul.mubr.f32.gmra.mrb[0].mxu0 %v451
    %v609 = vpop.f32.mrb[0].mxu0
    %v610 = vadd.f32 0.0, %v609
    %v611 = vpop.f32.mrb[0].mxu0
    %612 = vdwg.mxu0
    %v613 = vld [vmem:[%s1 + $0x18] sm:$0xff]
    %v614 = vld [vmem:[%s1 + $0x20] sm:$0xff]
    %v615 = vld [vmem:[%s1 + $0x40] sm:$0xff]
    %v616 = vld [vmem:[%s1 + $0x48] sm:$0xff]
    %v617 = vld [vmem:[%s1 + $0x68] sm:$0xff]
    %v618 = vld [vmem:[%s1 + $0x70] sm:$0xff]
    %v619 = vld [vmem:[%s1 + $0x90] sm:$0xff]
    %v620 = vld [vmem:[%s1 + $0x98] sm:$0xff]
    %v621 = vld [vmem:[%s1 + $0xb8] sm:$0xff]
    %v622 = vld [vmem:[%s1 + $0xc0] sm:$0xff]
    %v623 = vld [vmem:[%s1 + $0xe0] sm:$0xff]
    %v624 = vld [vmem:[%s1 + $0xe8] sm:$0xff]
    %v625 = vld [vmem:[%s1 + $0x108] sm:$0x1]
    %v626 = vld [vmem:[%s1 + $0x110] sm:$0x1]
    %vm627 = vcmask 400384
    %v629 = vsel %vm627, %v520, 0
    %v632 = vsel %vm627, %v525, 0
    %v635 = vsel %vm627, %v530, 0
    %v638 = vsel %vm627, %v600, 0
    %v641 = vsel %vm627, %v605, 0
    %v644 = vsel %vm627, %v610, 0
    %vm646 = vcmask 1040384
    %v648 = vsel %vm646, %v625, 0
    %v651 = vsel %vm646, %v626, 0
    %653 = vmatprep.subr.mxu0 %v614
    %654 = vmatpush1.msra.mxu0 %v613
    %655 = vmatprep.subr.mxu0 %v616
    %656 = vmatpush1.msra.mxu0 %v615
    %657 = vmatprep.subr.mxu0 %v618
    %658 = vmatpush1.msra.mxu0 %v617
    %659 = vmatprep.subr.mxu0 %v620
    %660 = vmatpush1.msra.mxu0 %v619
    %661 = vmatprep.subr.mxu0 %v622
    %662 = vmatpush1.msra.mxu0 %v621
    %663 = vmatprep.subr.mxu0 %v624
    %664 = vmatpush1.msra.mxu0 %v623
    %665 = vmatprep.subr.mxu0 %v651
    %666 = vmatpush1.msra.mxu0 %v648
    %667 = vmatprep.subr.mxu0 0.0
    %668 = vmatpush1.msra.mxu0 0.0
    %669 = vmatprep.subr.mxu0 0.0
    %670 = vmatpush1.msra.mxu0 0.0
    %671 = vmatprep.subr.mxu0 0.0
    %672 = vmatpush1.msra.mxu0 0.0
    %673 = vmatprep.subr.mxu0 0.0
    %674 = vmatpush1.msra.mxu0 0.0
    %675 = vmatprep.subr.mxu0 0.0
    %676 = vmatpush1.msra.mxu0 0.0
    %677 = vmatprep.subr.mxu0 0.0
    %678 = vmatpush1.msra.mxu0 0.0
    %679 = vmatprep.subr.mxu0 0.0
    %680 = vmatpush1.msra.mxu0 0.0
    %681 = vmatprep.subr.mxu0 0.0
    %682 = vmatpush1.msra.mxu0 0.0
    %683 = vmatprep.subr.mxu0 0.0
    %684 = vmatpush1.msra.mxu0 0.0
    %685 = vmatprep.subr.mxu0 0.0
    %686 = vmatpush1.msra.mxu0 0.0
    %687 = vmatprep.subr.mxu0 0.0
    %688 = vmatpush1.msra.mxu0 0.0
    %689 = vmatprep.subr.mxu0 0.0
    %690 = vmatpush1.msra.mxu0 0.0
    %691 = vmatprep.subr.mxu0 0.0
    %692 = vmatpush1.msra.mxu0 0.0
    %693 = vmatprep.subr.mxu0 0.0
    %694 = vmatpush1.msra.mxu0 0.0
    %695 = vmatprep.subr.mxu0 0.0
    %696 = vmatpush1.msra.mxu0 0.0
    %697 = vmatprep.subr.mxu0 0.0
    %698 = vmatpush1.msra.mxu0 0.0
    %699 = vmatprep.subr.mxu0 0.0
    %700 = vmatpush1.msra.mxu0 0.0
    %701 = vmatprep.subr.mxu0 0.0
    %702 = vmatpush1.msra.mxu0 0.0
    %703 = vmatprep.subr.mxu0 0.0
    %704 = vmatpush1.msra.mxu0 0.0
    %705 = vmatprep.subr.mxu0 0.0
    %706 = vmatpush1.msra.mxu0 0.0
    %707 = vmatprep.subr.mxu0 0.0
    %708 = vmatpush1.msra.mxu0 0.0
    %709 = vmatprep.subr.mxu0 0.0
    %710 = vmatpush1.msra.mxu0 0.0
    %711 = vmatprep.subr.mxu0 0.0
    %712 = vmatpush1.msra.mxu0 0.0
    %713 = vmatprep.subr.mxu0 0.0
    %714 = vmatpush1.msra.mxu0 0.0
    %715 = vmatprep.subr.mxu0 0.0
    %716 = vmatpush1.msra.mxu0 0.0
    %717 = vmatprep.mubr.f32.mxu0 0.0
    %718 = vmatmul.mubr.f32.gmra.mrb[0].mxu0 %v629
    %v719 = vpop.f32.mrb[0].mxu0
    %v720 = vadd.f32 0.0, %v719
    %v721 = vpop.f32.mrb[0].mxu0
    %722 = vmatprep.mubr.f32.mxu0 0.0
    %723 = vmatmul.mubr.f32.gmra.mrb[0].mxu0 %v632
    %v724 = vpop.f32.mrb[0].mxu0
    %v725 = vadd.f32 0.0, %v724
    %v726 = vpop.f32.mrb[0].mxu0
    %727 = vmatprep.mubr.f32.mxu0 0.0
    %728 = vmatmul.mubr.f32.gmra.mrb[0].mxu0 %v635
    %v729 = vpop.f32.mrb[0].mxu0
    %v730 = vadd.f32 0.0, %v729
    %v731 = vpop.f32.mrb[0].mxu0
    %v732 = vadd.f32 0.0, %v731
    %733 = vmatprep.mubr.f32.mxu0 0.0
    %734 = vmatmul.mubr.f32.gmra.mrb[0].mxu0 %v638
    %v735 = vpop.f32.mrb[0].mxu0
    %v736 = vadd.f32 0.0, %v735
    %v737 = vpop.f32.mrb[0].mxu0
    %738 = vmatprep.mubr.f32.mxu0 0.0
    %739 = vmatmul.mubr.f32.gmra.mrb[0].mxu0 %v641
    %v740 = vpop.f32.mrb[0].mxu0
    %v741 = vadd.f32 0.0, %v740
    %v742 = vpop.f32.mrb[0].mxu0
    %743 = vmatprep.mubr.f32.mxu0 0.0
    %744 = vmatmul.mubr.f32.gmra.mrb[0].mxu0 %v644
    %v745 = vpop.f32.mrb[0].mxu0
    %v746 = vadd.f32 0.0, %v745
    %v747 = vpop.f32.mrb[0].mxu0
    %v748 = vadd.f32 0.0, %v747
    %749 = vdwg.mxu0
    %752 = vrot.lane.b32.xlu0 %v725, 80
    %v753 = vpop.permute.xlu0 %752
    %754 = vrot.lane.b32.xlu0 %v741, 80
    %v755 = vpop.permute.xlu0 %754
    %v758 = vadd.f32 %v720, %v753
    %v759 = vadd.f32 %v736, %v755
    %764 = vrot.lane.b32.xlu0 %v730, 32
    %v765 = vpop.permute.xlu0 %764
    %766 = vrot.lane.b32.xlu0 %v732, 32
    %v767 = vpop.permute.xlu0 %766
    %768 = vrot.lane.b32.xlu0 %v746, 32
    %v769 = vpop.permute.xlu0 %768
    %770 = vrot.lane.b32.xlu0 %v748, 32
    %v771 = vpop.permute.xlu0 %770
    %vm772 = vcmask 261120
    %v773 = vsel %vm772, %v765, %v767
    %v774 = vsel %vm772, %v769, %v771
    %v777 = vadd.f32 %v758, %v773
    %v778 = vadd.f32 %v759, %v774
    %v779 = vld [vmem:[%s2] sm:$0xff]
    %782 = vrot.lane.b32.xlu0 %v777, 104
    %v783 = vpop.permute.xlu0 %782
    %784 = vrot.lane.b32.xlu0 %v778, 104
    %v785 = vpop.permute.xlu0 %784
    %v788 = vmax.f32 %v777, %v783
    %v789 = vmax.f32 %v778, %v785
    %791 = vset.pattern.permute.xlu0 4
    %792 = vperm.xlu0 %791, %v779
    %v793 = vpop.permute.xlu0 %792
    %v795 = vadd.f32 %v788, %v793
    %v796 = vadd.f32 %v789, %v793
    %v797 = vmax.f32 %v795, 0.0
    %v798 = vmax.f32 %v796, 0.0
    %v799 = vld [vmem:[%s4] sm:$0xff]
    %v800 = vld [vmem:[%s4 + $0x8] sm:$0xff]
    %v801 = vld [vmem:[%s4 + $0x18] sm:$0xff]
    %v802 = vld [vmem:[%s4 + $0x20] sm:$0xff]
    %v803 = vld [vmem:[%s4 + $0x30] sm:$0xff]
    %v804 = vld [vmem:[%s4 + $0x38] sm:$0xff]
    %vm805 = vcmask 195584
    %v807 = vsel %vm805, %v797, 0
    %v810 = vsel %vm805, %v798, 0
    %812 = vmatprep.subr.mxu0 %v800
    %813 = vmatpush1.msra.mxu0 %v799
    %814 = vmatprep.subr.mxu0 %v802
    %815 = vmatpush1.msra.mxu0 %v801
    %816 = vmatprep.subr.mxu0 %v804
    %817 = vmatpush1.msra.mxu0 %v803
    %818 = vmatprep.subr.mxu0 0.0
    %819 = vmatpush1.msra.mxu0 0.0
    %820 = vmatprep.subr.mxu0 0.0
    %821 = vmatpush1.msra.mxu0 0.0
    %822 = vmatprep.subr.mxu0 0.0
    %823 = vmatpush1.msra.mxu0 0.0
    %824 = vmatprep.subr.mxu0 0.0
    %825 = vmatpush1.msra.mxu0 0.0
    %826 = vmatprep.subr.mxu0 0.0
    %827 = vmatpush1.msra.mxu0 0.0
    %828 = vmatprep.subr.mxu0 0.0
    %829 = vmatpush1.msra.mxu0 0.0
    %830 = vmatprep.subr.mxu0 0.0
    %831 = vmatpush1.msra.mxu0 0.0
    %832 = vmatprep.subr.mxu0 0.0
    %833 = vmatpush1.msra.mxu0 0.0
    %834 = vmatprep.subr.mxu0 0.0
    %835 = vmatpush1.msra.mxu0 0.0
    %836 = vmatprep.subr.mxu0 0.0
    %837 = vmatpush1.msra.mxu0 0.0
    %838 = vmatprep.subr.mxu0 0.0
    %839 = vmatpush1.msra.mxu0 0.0
    %840 = vmatprep.subr.mxu0 0.0
    %841 = vmatpush1.msra.mxu0 0.0
    %842 = vmatprep.subr.mxu0 0.0
    %843 = vmatpush1.msra.mxu0 0.0
    %844 = vmatprep.subr.mxu0 0.0
    %845 = vmatpush1.msra.mxu0 0.0
    %846 = vmatprep.subr.mxu0 0.0
    %847 = vmatpush1.msra.mxu0 0.0
    %848 = vmatprep.subr.mxu0 0.0
    %849 = vmatpush1.msra.mxu0 0.0
    %850 = vmatprep.subr.mxu0 0.0
    %851 = vmatpush1.msra.mxu0 0.0
    %852 = vmatprep.subr.mxu0 0.0
    %853 = vmatpush1.msra.mxu0 0.0
    %854 = vmatprep.subr.mxu0 0.0
    %855 = vmatpush1.msra.mxu0 0.0
    %856 = vmatprep.subr.mxu0 0.0
    %857 = vmatpush1.msra.mxu0 0.0
    %858 = vmatprep.subr.mxu0 0.0
    %859 = vmatpush1.msra.mxu0 0.0
    %860 = vmatprep.subr.mxu0 0.0
    %861 = vmatpush1.msra.mxu0 0.0
    %862 = vmatprep.subr.mxu0 0.0
    %863 = vmatpush1.msra.mxu0 0.0
    %864 = vmatprep.subr.mxu0 0.0
    %865 = vmatpush1.msra.mxu0 0.0
    %866 = vmatprep.subr.mxu0 0.0
    %867 = vmatpush1.msra.mxu0 0.0
    %868 = vmatprep.subr.mxu0 0.0
    %869 = vmatpush1.msra.mxu0 0.0
    %870 = vmatprep.subr.mxu0 0.0
    %871 = vmatpush1.msra.mxu0 0.0
    %872 = vmatprep.subr.mxu0 0.0
    %873 = vmatpush1.msra.mxu0 0.0
    %874 = vmatprep.subr.mxu0 0.0
    %875 = vmatpush1.msra.mxu0 0.0
    %876 = vmatprep.mubr.f32.mxu0 0.0
    %877 = vmatmul.mubr.f32.gmra.mrb[0].mxu0 %v807
    %v878 = vpop.f32.mrb[0].mxu0
    %v879 = vadd.f32 0.0, %v878
    %v880 = vpop.f32.mrb[0].mxu0
    %v881 = vadd.f32 0.0, %v880
    %882 = vmatprep.mubr.f32.mxu0 0.0
    %883 = vmatmul.mubr.f32.gmra.mrb[0].mxu0 %v810
    %v884 = vpop.f32.mrb[0].mxu0
    %v885 = vadd.f32 0.0, %v884
    %v886 = vpop.f32.mrb[0].mxu0
    %v887 = vadd.f32 0.0, %v886
    %888 = vdwg.mxu0
    %v891 = vrot.slane %v879, 1
    %v892 = vrot.slane %v885, 1
    %893 = vrot.lane.b32.xlu0 %v891, 96
    %v894 = vpop.permute.xlu0 %893
    %895 = vrot.lane.b32.xlu0 %v892, 96
    %v896 = vpop.permute.xlu0 %895
    %v899 = vadd.f32 %v879, %v894
    %v900 = vadd.f32 %v885, %v896
    %v901 = vrot.slane %v879, 2
    %v902 = vrot.slane %v885, 2
    %903 = vrot.lane.b32.xlu0 %v901, 64
    %v904 = vpop.permute.xlu0 %903
    %905 = vrot.lane.b32.xlu0 %v902, 64
    %v906 = vpop.permute.xlu0 %905
    %v909 = vadd.f32 %v899, %v904
    %v910 = vadd.f32 %v900, %v906
    %v911 = vrot.slane %v879, 3
    %v912 = vrot.slane %v885, 3
    %913 = vrot.lane.b32.xlu0 %v911, 32
    %v914 = vpop.permute.xlu0 %913
    %915 = vrot.lane.b32.xlu0 %v912, 32
    %v916 = vpop.permute.xlu0 %915
    %v919 = vadd.f32 %v909, %v914
    %v920 = vadd.f32 %v910, %v916
    %v923 = vrot.slane %v881, 4
    %v924 = vrot.slane %v887, 4
    %v927 = vadd.f32 %v919, %v923
    %v928 = vadd.f32 %v920, %v924
    %v929 = vrot.slane %v881, 5
    %v930 = vrot.slane %v887, 5
    %931 = vrot.lane.b32.xlu0 %v929, 96
    %v932 = vpop.permute.xlu0 %931
    %933 = vrot.lane.b32.xlu0 %v930, 96
    %v934 = vpop.permute.xlu0 %933
    %v937 = vadd.f32 %v927, %v932
    %v938 = vadd.f32 %v928, %v934
    %v939 = vrot.slane %v881, 6
    %v940 = vrot.slane %v887, 6
    %941 = vrot.lane.b32.xlu0 %v939, 64
    %v942 = vpop.permute.xlu0 %941
    %943 = vrot.lane.b32.xlu0 %v940, 64
    %v944 = vpop.permute.xlu0 %943
    %v947 = vadd.f32 %v937, %v942
    %v948 = vadd.f32 %v938, %v944
    %v949 = vrot.slane %v881, 7
    %v950 = vrot.slane %v887, 7
    %951 = vrot.lane.b32.xlu0 %v949, 32
    %v952 = vpop.permute.xlu0 %951
    %953 = vrot.lane.b32.xlu0 %v950, 32
    %v954 = vpop.permute.xlu0 %953
    %v957 = vadd.f32 %v947, %v952
    %v958 = vadd.f32 %v948, %v954
    %v959 = vld [vmem:[%s2] sm:$0x1]
    %v960 = vlaneseq
    %v961 = vshrl.u32 %v960, 7
    %v962 = vsub.s32 0, %v961
    %v963 = vrot.slane %v959, %v962
    %965 = vrot.lane.b32.xlu0 %v963, 123
    %v966 = vpop.permute.xlu0 %965
    %v968 = vadd.f32 %v957, %v966
    %v969 = vadd.f32 %v958, %v966
    %v970 = vmax.f32 %v968, 0.0
    %v971 = vmax.f32 %v969, 0.0
    %v972 = vld [vmem:[%s4 + $0x10] sm:$0xff]
    %v973 = vld [vmem:[%s4 + $0x28] sm:$0xff]
    %v974 = vld [vmem:[%s4 + $0x40] sm:$0xff]
    %v975 = vld [vmem:[%s4 + $0x58] sm:$0xff]
    %v978 = vrot.slane %v971, 7
    %vm979 = vcmask 1041409
    %v980 = vsel %vm979, %v978, %v970
    %981 = vrot.lane.b32.xlu0 %v963, 91
    %v982 = vpop.permute.xlu0 %981
    %v984 = vsel %vm772, %v980, 0
    %986 = vmatprep.subr.mxu0 0.0
    %987 = vmatpush1.msra.mxu0 %v972
    %988 = vmatprep.subr.mxu0 0.0
    %989 = vmatpush1.msra.mxu0 %v973
    %990 = vmatprep.subr.mxu0 0.0
    %991 = vmatpush1.msra.mxu0 %v974
    %992 = vmatprep.subr.mxu0 0.0
    %993 = vmatpush1.msra.mxu0 %v975
    %994 = vmatprep.subr.mxu0 0.0
    %995 = vmatpush1.msra.mxu0 0.0
    %996 = vmatprep.subr.mxu0 0.0
    %997 = vmatpush1.msra.mxu0 0.0
    %998 = vmatprep.subr.mxu0 0.0
    %999 = vmatpush1.msra.mxu0 0.0
    %1000 = vmatprep.subr.mxu0 0.0
    %1001 = vmatpush1.msra.mxu0 0.0
    %1002 = vmatprep.subr.mxu0 0.0
    %1003 = vmatpush1.msra.mxu0 0.0
    %1004 = vmatprep.subr.mxu0 0.0
    %1005 = vmatpush1.msra.mxu0 0.0
    %1006 = vmatprep.subr.mxu0 0.0
    %1007 = vmatpush1.msra.mxu0 0.0
    %1008 = vmatprep.subr.mxu0 0.0
    %1009 = vmatpush1.msra.mxu0 0.0
    %1010 = vmatprep.subr.mxu0 0.0
    %1011 = vmatpush1.msra.mxu0 0.0
    %1012 = vmatprep.subr.mxu0 0.0
    %1013 = vmatpush1.msra.mxu0 0.0
    %1014 = vmatprep.subr.mxu0 0.0
    %1015 = vmatpush1.msra.mxu0 0.0
    %1016 = vmatprep.subr.mxu0 0.0
    %1017 = vmatpush1.msra.mxu0 0.0
    %1018 = vmatprep.subr.mxu0 0.0
    %1019 = vmatpush1.msra.mxu0 0.0
    %1020 = vmatprep.subr.mxu0 0.0
    %1021 = vmatpush1.msra.mxu0 0.0
    %1022 = vmatprep.subr.mxu0 0.0
    %1023 = vmatpush1.msra.mxu0 0.0
    %1024 = vmatprep.subr.mxu0 0.0
    %1025 = vmatpush1.msra.mxu0 0.0
    %1026 = vmatprep.subr.mxu0 0.0
    %1027 = vmatpush1.msra.mxu0 0.0
    %1028 = vmatprep.subr.mxu0 0.0
    %1029 = vmatpush1.msra.mxu0 0.0
    %1030 = vmatprep.subr.mxu0 0.0
    %1031 = vmatpush1.msra.mxu0 0.0
    %1032 = vmatprep.subr.mxu0 0.0
    %1033 = vmatpush1.msra.mxu0 0.0
    %1034 = vmatprep.subr.mxu0 0.0
    %1035 = vmatpush1.msra.mxu0 0.0
    %1036 = vmatprep.subr.mxu0 0.0
    %1037 = vmatpush1.msra.mxu0 0.0
    %1038 = vmatprep.subr.mxu0 0.0
    %1039 = vmatpush1.msra.mxu0 0.0
    %1040 = vmatprep.subr.mxu0 0.0
    %1041 = vmatpush1.msra.mxu0 0.0
    %1042 = vmatprep.subr.mxu0 0.0
    %1043 = vmatpush1.msra.mxu0 0.0
    %1044 = vmatprep.subr.mxu0 0.0
    %1045 = vmatpush1.msra.mxu0 0.0
    %1046 = vmatprep.subr.mxu0 0.0
    %1047 = vmatpush1.msra.mxu0 0.0
    %1048 = vmatprep.subr.mxu0 0.0
    %1049 = vmatpush1.msra.mxu0 0.0
    %1050 = vmatprep.mubr.f32.mxu0 0.0
    %1051 = vmatmul.mubr.f32.gmra.mrb[0].mxu0 %v984
    %v1052 = vpop.f32.mrb[0].mxu0
    %v1053 = vadd.f32 %v982, %v1052
    %v1054 = vpop.f32.mrb[0].mxu0
    %1055 = vdwg.mxu0
    %vm1056 = vcmask 25600
    %v1057 = vsel %vm1056, %v1053, -inf
    %1058 = vmax.xlane.f32.xlu0 %v1057
    %v1059 = vpop.xlane.xlu0 %1058
    %v1060 = vsub.f32 %v1053, %v1059
    %v1061 = vmul.f32 %v1060, 1.442695
    %v1062 = vpow.pop %v1061
    %v1063 = vsel %vm1056, %v1062, 0.0
    %1064 = vadd.xlane.f32.xlu0 %v1063
    %v1065 = vpop.xlane.xlu0 %1064
    %v1066 = vlog2.pop %v1065
    %v1067 = vmul.f32 %v1066, 0.6931472
    %v1068 = vadd.f32 %v1067, %v1059
    %v1069 = vsub.f32 %v1053, %v1068
    %1070 = vst.msk [vmem:[#allocation2] sm:$0x3] %vm1056, %v1069
    // Predicated region
    $region22: #{montage_forward.1} parent=1 // pred_check
      _
    $region23: #{montage_forward.1} parent=1 // pred_check_branch
      %1072 = sbr.rel (0) target = $region25
    $region24: #{montage_forward.1} parent=1 // pred_region
      %s1074 = ssub.s32 32, 32
      %1075 = vsyncadd [#allocation3], %s1074
      %s1077 = sshll.u32 [#allocation2], 4
      %s1078 = int_to_ptr.vmem [resolvable:$true] %s1077
      %1080 = dma.vmem_to_hbm [thread:$0]  %s1078, 32, %s5, [#allocation3]
    $region25: #{montage_forward.1} parent=1 // pred_fallthru
      _
    // Predicated region
    $region26: #{montage_forward.1} parent=1 // pred_check
      _
    $region27: #{montage_forward.1} parent=1 // pred_check_branch
      %1082 = sbr.rel (0) target = $region29
    $region28: #{montage_forward.1} parent=1 // pred_region
      %1083 = dma.done [#allocation3], 32
    $region29: #{montage_forward.1} parent=1 // pred_fallthru
      _
    %1084 = vsyncpa [#allocation3], 1

</llo_original>
